<compile_context>
chip_gen: v7x
topology: tpu7x:2x2x1
jax: 0.10.0
libtpu: 0.0.40
codegen_flags: <defaults>
</compile_context>

<pallas_src>
import jax
import jax.numpy as jnp
from jax.experimental import pallas as pl
from jax.experimental.pallas import tpu as pltpu

_LANES = 512            # slab width: multiple of 128 -> unmasked lane-dense stores
_BLOCK_ROWS = 2048      # (2048, 512) f32 = 4 MiB/block; multiple of 32 sublanes
_VMEM_LIMIT = 32 << 20  # 4 buffers x 4 MiB = 16 MiB << 32 MiB; safe on v5e/v6e/v7x


def _add_one_kernel(x_ref, o_ref):
    # The entire forward pass of YN: output = input + 1
    o_ref[...] = x_ref[...] + jnp.asarray(1, dtype=o_ref.dtype)


def _packing(dtype):
    # Sublane packing factor: 1 for 32-bit, 2 for bf16/f16, 4 for int8/fp8.
    return max(1, 4 // jnp.dtype(dtype).itemsize)


@jax.jit
def _add_one_pallas(x):
    """Pallas path: x.size is a multiple of _LANES, so the reshape is free."""
    orig_shape = x.shape
    rows = x.size // _LANES
    x2d = x.reshape(rows, _LANES)  # free row-major reshape, no HBM copy

    # block_rows is either _BLOCK_ROWS (multiple of 32 sublanes) or the full
    # row extent; both satisfy the (sublane, 128) block-shape rule for any
    # supported dtype.  A ragged last grid block is handled by Pallas.
    block_rows = min(_BLOCK_ROWS, rows)
    grid = (pl.cdiv(rows, block_rows),)

    out2d = pl.pallas_call(
        _add_one_kernel,
        out_shape=jax.ShapeDtypeStruct((rows, _LANES), x.dtype),
        grid_spec=pl.GridSpec(
            grid=grid,
            in_specs=[pl.BlockSpec((block_rows, _LANES), lambda i: (i, 0))],
            out_specs=pl.BlockSpec((block_rows, _LANES), lambda i: (i, 0)),
        ),
        compiler_params=pltpu.CompilerParams(
            dimension_semantics=("parallel",),   # shards rows across v7x's 2 TCs
            vmem_limit_bytes=_VMEM_LIMIT,        # keeps 4 MiB blocks legal on v5e
        ),
    )(x2d)

    return out2d.reshape(orig_shape)


def yn_forward(x):
    """Pallas implementation of YN.forward: returns x + 1 (same shape/dtype)."""
    x = jnp.asarray(x)
    n = x.size
    min_elems = 8 * 128 * _packing(x.dtype)   # one vreg tile of work (dtype-aware)
    if n < min_elems or n % _LANES != 0:
        # Tiny inputs (launch overhead dominates) or inputs that would need
        # padding + tail-slice HBM round trips: a single fused XLA add is the
        # roofline-optimal choice for this memory-bound op.
        return x + jnp.asarray(1, dtype=x.dtype)
    return _add_one_pallas(x)


if __name__ == "__main__":
    # Matches the reference script: x = torch.tensor(1.0)
    x_scalar = jnp.float32(1.0)
    out_scalar = jax.block_until_ready(yn_forward(x_scalar))
    assert out_scalar.shape == ()
    assert jnp.allclose(out_scalar, 2.0), out_scalar

    # Small 4-D tensor (2048 f32 elems, multiple of 512 -> Pallas path, grid=1).
    key = jax.random.PRNGKey(0)
    x_arr = jax.random.normal(key, (2, 4, 16, 16), dtype=jnp.float32)
    out_arr = jax.block_until_ready(yn_forward(x_arr))
    assert out_arr.shape == x_arr.shape
    assert jnp.allclose(out_arr, x_arr + 1.0), "4-D array mismatch"

    # 2-D input that exercises the multi-block grid (rows=4096 > block_rows).
    x_big = jax.random.normal(jax.random.PRNGKey(1), (4096, 512), dtype=jnp.float32)
    out_big = jax.block_until_ready(yn_forward(x_big))
    assert jnp.allclose(out_big, x_big + 1.0), "multi-block mismatch"

    # Odd, non-512-multiple shape -> XLA fallback (no pad / slice-back traffic).
    x_odd = jax.random.normal(jax.random.PRNGKey(2), (37, 193), dtype=jnp.float32)
    out_odd = jax.block_until_ready(yn_forward(x_odd))
    assert jnp.allclose(out_odd, x_odd + 1.0), "odd-shape mismatch"

    print("KERNEL_OK")
</pallas_src>

<mosaic_0001>
module attributes {stable_mosaic.version = 11 : i64} {
  func.func @_add_one_kernel(%arg0: i32, %arg1: memref<4x512xf32, #tpu.memory_space<vmem>>, %arg2: memref<4x512xf32, #tpu.memory_space<vmem>>) attributes {dimension_semantics = [#tpu.dimension_semantics<parallel>], iteration_bounds = array<i64: 1>, scalar_prefetch = 0 : i64, scratch_operands = 0 : i64, tpu.core_type = #tpu.core_type<tc>, window_params = [{transform_indices = @transform_0, window_bounds = array<i64: 4, 512>}, {transform_indices = @transform_1, window_bounds = array<i64: 4, 512>}]} {
    %c0 = arith.constant 0 : index
    %c0_0 = arith.constant 0 : index
    %0 = vector.load %arg1[%c0, %c0_0] : memref<4x512xf32, #tpu.memory_space<vmem>>, vector<4x512xf32>
    %cst = arith.constant 1.000000e+00 : f32
    %1 = vector.broadcast %cst : f32 to vector<4x512xf32>
    %2 = arith.addf %0, %1 : vector<4x512xf32>
    %c0_1 = arith.constant 0 : index
    %c0_2 = arith.constant 0 : index
    %3 = vector.load %arg2[%c0_1, %c0_2] : memref<4x512xf32, #tpu.memory_space<vmem>>, vector<4x512xf32>
    tpu.vector_store %arg2[%c0_1, %c0_2], %2 {strides = array<i32>} : memref<4x512xf32, #tpu.memory_space<vmem>>, vector<4x512xf32>,
    return
  }
  func.func @transform_0(%arg0: i32) -> (i32, i32) {
    %c0_i32 = arith.constant 0 : i32
    %c0_i32_0 = arith.constant 0 : i32
    return %arg0, %c0_i32 : i32, i32
  }
  func.func @transform_1(%arg0: i32) -> (i32, i32) {
    %c0_i32 = arith.constant 0 : i32
    %c0_i32_0 = arith.constant 0 : i32
    return %arg0, %c0_i32 : i32, i32
  }
}

</mosaic_0001>

<llo_original>
// kernel: _add_one_pallas.1
$region0: #{_add_one_pallas.1}
  #allocation0 [shape = 'u32[]', space=smem, size = 0x4, offset = 0x4, fixed_abs, tag = 'smem constant byte address 0x4 - core index']
  #allocation1 [shape = 'u32[144,128]{1,0:T(1,128)}', space=vmem, size = 0x12000, scoped, tag = 'internal scratch']
  %s0 = inlined_call_operand.vmem [shape: f32[4,512], index: 0, kind: input, shape index: {}]
  %s1 = inlined_call_operand.vmem [shape: f32[4,512], index: 1, kind: output, shape index: {}]
  %s2 = sld [smem:[#allocation0]]
  $region14: #{_add_one_pallas.1} parent=0
    _
  %s4 = ssub.s32 1, %s2
  %s5 = scalar_select 0, %s4, %s2
  // Predicated region
  $region2: #{_add_one_pallas.1} parent=0 // pred_check
    _
  $region3: #{_add_one_pallas.1} parent=0 // pred_check_branch
    %7 = sbr.rel (0) target = $region5
  $region4: #{_add_one_pallas.1} parent=0 // pred_region
    _
  $region5: #{_add_one_pallas.1} parent=0 // pred_fallthru
    _
  %v8 = vld [vmem:[%s0] sm:$0xff]
  %v9 = vld [vmem:[%s0 + $0x8] sm:$0xff]
  %v10 = vadd.f32 %v8, 1.0
  %v11 = vadd.f32 %v9, 1.0
  %12 = vst [vmem:[%s1] sm:$0xff] %v10
  %13 = vst [vmem:[%s1 + $0x8] sm:$0xff] %v11
  // Predicated region
  $region6: #{_add_one_pallas.1} parent=0 // pred_check
    _
  $region7: #{_add_one_pallas.1} parent=0 // pred_check_branch
    %15 = sbr.rel (0) target = $region9
  $region8: #{_add_one_pallas.1} parent=0 // pred_region
    _
  $region9: #{_add_one_pallas.1} parent=0 // pred_fallthru
    _
  // Predicated region
  $region10: #{_add_one_pallas.1} parent=0 // pred_check
    _
  $region11: #{_add_one_pallas.1} parent=0 // pred_check_branch
    %17 = sbr.rel (0) target = $region13
  $region12: #{_add_one_pallas.1} parent=0 // pred_region
    _
  $region13: #{_add_one_pallas.1} parent=0 // pred_fallthru
    _

</llo_original>
